<compile_context>
chip_gen: v6e
topology: v6e:2x2x1
jax: 0.10.0
libtpu: 0.0.40
codegen_flags: <defaults>
</compile_context>

<pallas_src>
import jax
import jax.numpy as jnp
from jax.experimental import pallas as pl
from jax.experimental.pallas import tpu as pltpu


def _round_up(x, m):
    return ((x + m - 1) // m) * m


def clip_wrapper_kernel(x_ref, wt_ref, bt_ref, out_ref):
    """Fully folded ClipWrapper forward for one batch tile.

    x_ref  : (TILE_B, D)      bf16  patch-mean-pooled pixels (streamed)
    wt_ref : (D, NC_PAD)      bf16  folded Wp @ Wproj @ Wh_pad weight (resident)
    bt_ref : (1, NC_PAD)      f32   folded bias (resident; broadcast add in-kernel)
    out_ref: (TILE_B, NC_PAD) f32   lane-dense (128-wide) padded logits
    """
    acc = jnp.dot(x_ref[...], wt_ref[...], preferred_element_type=jnp.float32)
    out_ref[...] = (acc + bt_ref[...]).astype(out_ref.dtype)


def clip_wrapper_forward(x_nchw, params, patch=8, tile_b=512,
                         compute_dtype=jnp.bfloat16, out_dtype=jnp.float32):
    """x_nchw: (B, C, H, W) float32; returns (B, num_classes) out_dtype."""
    wp, bp, wproj, bproj, wh, bh = params
    B, C, H, W = x_nchw.shape
    ph = pw = patch
    D = C * ph * pw
    num_classes = wh.shape[1]

    # ---- plain-JAX glue (layout plumbing, done once by XLA) -----------------
    # Mean pool over patch positions commuted in front of the (linear) patch embed:
    #   mean_p(x_p @ Wp + bp) == (mean_p x_p) @ Wp + bp.
    # Direct structured reduce over the patch-grid axes; the remaining (C, ph, pw)
    # ordering matches Wp's input-feature ordering.
    pooled = (x_nchw.reshape(B, C, H // ph, ph, W // pw, pw)
              .mean(axis=(2, 4))
              .reshape(B, D))

    # Lane-dense output: zero-pad num_classes up to a multiple of 128, then fold the
    # whole affine chain (patch embed -> projection -> head) into one weight/bias.
    nc_pad = max(128, _round_up(num_classes, 128))
    wh_pad = jnp.zeros((wh.shape[0], nc_pad), jnp.float32).at[:, :num_classes].set(wh)
    bh_pad = jnp.zeros((1, nc_pad), jnp.float32).at[:, :num_classes].set(bh)
    w_tail = wproj @ wh_pad                                   # (hidden, nc_pad)
    w_total = wp @ w_tail                                     # (D, nc_pad)
    b_total = bp @ w_tail + bproj @ wh_pad + bh_pad           # (1, nc_pad)

    # Batch tiling: multiple of 16 rows (bf16 sublane pack); big tiles for big B,
    # one minimal tile for tiny B.
    tile_b = max(16, _round_up(min(tile_b, B), 16))
    b_pad = _round_up(B, tile_b)

    # bf16 MXU operands, f32 accumulation; bias stays f32 and un-broadcast.
    x_in = jnp.pad(pooled.astype(compute_dtype), ((0, b_pad - B), (0, 0)))  # (b_pad, D)
    wt_in = w_total.astype(compute_dtype)                                   # (D, nc_pad)
    bt_in = b_total.astype(jnp.float32)                                     # (1, nc_pad)

    grid = (b_pad // tile_b,)
    out = pl.pallas_call(
        clip_wrapper_kernel,
        out_shape=jax.ShapeDtypeStruct((b_pad, nc_pad), out_dtype),
        grid_spec=pltpu.PrefetchScalarGridSpec(
            num_scalar_prefetch=0,
            grid=grid,
            in_specs=[
                pl.BlockSpec((tile_b, D), lambda b: (b, 0)),      # streamed input
                pl.BlockSpec((D, nc_pad), lambda b: (0, 0)),      # resident weight
                pl.BlockSpec((1, nc_pad), lambda b: (0, 0)),      # resident bias
            ],
            out_specs=pl.BlockSpec((tile_b, nc_pad), lambda b: (b, 0)),
        ),
        compiler_params=pltpu.CompilerParams(
            dimension_semantics=("parallel",),   # megacore-shardable batch axis
        ),
    )(x_in, wt_in, bt_in)
    return out[:B, :num_classes]


def _reference(x_nchw, params, patch=8):
    """Unfused f32 reference matching the original module semantics."""
    wp, bp, wproj, bproj, wh, bh = params
    B, C, H, W = x_nchw.shape
    ph = pw = patch
    P = (H // ph) * (W // pw)
    patches = (x_nchw.reshape(B, C, H // ph, ph, W // pw, pw)
               .transpose(0, 2, 4, 1, 3, 5)
               .reshape(B, P, C * ph * pw))
    h = patches.reshape(B * P, -1) @ wp + bp
    h = h.reshape(B, P, -1).mean(axis=1)
    feats = h @ wproj + bproj          # image_features = clip_output[0]
    return feats @ wh + bh             # model_linear(image_features)


if __name__ == "__main__":
    key = jax.random.PRNGKey(0)
    B, C, H, W = 2, 4, 16, 16
    patch = 8
    patch_dim = C * patch * patch          # 256 (MXU-aligned K)
    hidden = 64
    embed_dim = 32
    num_classes = 8

    k = jax.random.split(key, 7)
    x = jax.random.normal(k[0], (B, C, H, W), dtype=jnp.float32)
    wp    = jax.random.normal(k[1], (patch_dim, hidden), jnp.float32) * (1.0 / patch_dim ** 0.5)
    bp    = jax.random.normal(k[2], (1, hidden), jnp.float32) * 0.01
    wproj = jax.random.normal(k[3], (hidden, embed_dim), jnp.float32) * (1.0 / hidden ** 0.5)
    bproj = jax.random.normal(k[4], (1, embed_dim), jnp.float32) * 0.01
    wh    = jax.random.normal(k[5], (embed_dim, num_classes), jnp.float32) * (1.0 / embed_dim ** 0.5)
    bh    = jax.random.normal(k[6], (1, num_classes), jnp.float32) * 0.01
    params = (wp, bp, wproj, bproj, wh, bh)

    out = clip_wrapper_forward(x, params, patch=patch)
    out = jax.block_until_ready(out)

    ref = _reference(x, params, patch=patch)
    assert out.shape == (B, num_classes)
    # bf16 operands / f32 accumulation + f32 weight folding: bf16-level tolerance
    # vs. the unfused f32 reference.
    assert jnp.allclose(out, ref, atol=3e-2, rtol=3e-2), (out, ref)
    print("KERNEL_OK")
</pallas_src>

<mosaic_0001>
module attributes {stable_mosaic.version = 11 : i64} {
  func.func @clip_wrapper_kernel(%arg0: i32, %arg1: memref<16x256xbf16, #tpu.memory_space<vmem>>, %arg2: memref<256x128xbf16, #tpu.memory_space<vmem>>, %arg3: memref<1x128xf32, #tpu.memory_space<vmem>>, %arg4: memref<16x128xf32, #tpu.memory_space<vmem>>) attributes {dimension_semantics = [#tpu.dimension_semantics<parallel>], iteration_bounds = array<i64: 1>, scalar_prefetch = 0 : i64, scratch_operands = 0 : i64, tpu.core_type = #tpu.core_type<tc>, window_params = [{transform_indices = @transform_0, window_bounds = array<i64: 16, 256>}, {pipeline_mode = #tpu.pipeline_mode<synchronous>, transform_indices = @transform_1, window_bounds = array<i64: 256, 128>}, {pipeline_mode = #tpu.pipeline_mode<synchronous>, transform_indices = @transform_2, window_bounds = array<i64: 1, 128>}, {transform_indices = @transform_3, window_bounds = array<i64: 16, 128>}]} {
    %c0 = arith.constant 0 : index
    %c0_0 = arith.constant 0 : index
    %0 = vector.load %arg1[%c0, %c0_0] : memref<16x256xbf16, #tpu.memory_space<vmem>>, vector<16x256xbf16>
    %c0_1 = arith.constant 0 : index
    %c0_2 = arith.constant 0 : index
    %1 = vector.load %arg2[%c0_1, %c0_2] : memref<256x128xbf16, #tpu.memory_space<vmem>>, vector<256x128xbf16>
    %cst = arith.constant dense<0.000000e+00> : vector<16x128xf32>
    %2 = tpu.matmul %0, %1, %cst {dimension_numbers = #tpu.dot_dimension_numbers<[1], [0], [0], [1], [0, 0, 1, 1], [], []>} : vector<16x256xbf16>, vector<256x128xbf16>, vector<16x128xf32> -> vector<16x128xf32>
    %c0_3 = arith.constant 0 : index
    %c0_4 = arith.constant 0 : index
    %3 = vector.load %arg3[%c0_3, %c0_4] : memref<1x128xf32, #tpu.memory_space<vmem>>, vector<1x128xf32>
    %4 = vector.broadcast %3 : vector<1x128xf32> to vector<16x128xf32>
    %5 = arith.addf %2, %4 : vector<16x128xf32>
    %c0_5 = arith.constant 0 : index
    %c0_6 = arith.constant 0 : index
    %6 = vector.load %arg4[%c0_5, %c0_6] : memref<16x128xf32, #tpu.memory_space<vmem>>, vector<16x128xf32>
    tpu.vector_store %arg4[%c0_5, %c0_6], %5 {strides = array<i32>} : memref<16x128xf32, #tpu.memory_space<vmem>>, vector<16x128xf32>,
    return
  }
  func.func @transform_0(%arg0: i32) -> (i32, i32) {
    %c0_i32 = arith.constant 0 : i32
    %c0_i32_0 = arith.constant 0 : i32
    return %arg0, %c0_i32 : i32, i32
  }
  func.func @transform_1(%arg0: i32) -> (i32, i32) {
    %c0_i32 = arith.constant 0 : i32
    %c0_i32_0 = arith.constant 0 : i32
    %c0_i32_1 = arith.constant 0 : i32
    return %c0_i32, %c0_i32_0 : i32, i32
  }
  func.func @transform_2(%arg0: i32) -> (i32, i32) {
    %c0_i32 = arith.constant 0 : i32
    %c0_i32_0 = arith.constant 0 : i32
    %c0_i32_1 = arith.constant 0 : i32
    return %c0_i32, %c0_i32_0 : i32, i32
  }
  func.func @transform_3(%arg0: i32) -> (i32, i32) {
    %c0_i32 = arith.constant 0 : i32
    %c0_i32_0 = arith.constant 0 : i32
    return %arg0, %c0_i32 : i32, i32
  }
}

</mosaic_0001>

<llo_original>
// kernel: tpu_custom_call.1
$region0: #{tpu_custom_call.1}
  #allocation0 [shape = 'u32[]', space=smem, size = 0x4, offset = 0x4, fixed_abs, tag = 'smem constant byte address 0x4 - core index']
  #allocation1 [shape = 'u32[144,128]{1,0:T(1,128)}', space=vmem, size = 0x12000, scoped, tag = 'internal scratch']
  %s0 = inlined_call_operand.hbm [shape: bf16[16,256], index: 0, kind: input, shape index: {}]
  %s1 = inlined_call_operand.hbm [shape: bf16[256,128], index: 1, kind: input, shape index: {}]
  %s2 = inlined_call_operand.vmem [shape: f32[1,128], index: 2, kind: input, shape index: {}]
  %s3 = inlined_call_operand.hbm [shape: f32[16,128], index: 3, kind: output, shape index: {}]
  %s4 = sld [smem:[#allocation0]]
  $region30: #{tpu_custom_call.1} parent=0
    _
  %s6 = ssub.s32 1, %s4
  %s7 = scalar_select 0, %s6, %s4
  $region1: #{tpu_custom_call.1} parent=0
    #allocation2 [shape = 'u8[8192]{0}', space=vmem, size = 0x2000, scoped, tag = 'input window, operand 0, single buffered']
    #allocation3 [shape = 's32[1]{0}', space=sflag, size = 0x4, scoped, tag = 'scoped memory for tpu_custom_call.1']
    #allocation4 [shape = 's32[1]{0}', space=sflag, size = 0x4, scoped, tag = 'scoped memory for tpu_custom_call.1']
    #allocation5 [shape = 'u8[65536]{0}', space=vmem, size = 0x10000, scoped, tag = 'input window, operand 1, single buffered']
    #allocation6 [shape = 's32[1]{0}', space=sflag, size = 0x4, scoped, tag = 'scoped memory for tpu_custom_call.1']
    #allocation7 [shape = 'u8[8192]{0}', space=vmem, size = 0x2000, scoped, tag = 'output window, operand 0, single buffered']
    %8 = vsyncpa [#allocation3], 0
    %9 = vsyncpa [#allocation6], 0
    %10 = vsyncpa [#allocation4], 0
    // Predicated region
    $region2: #{tpu_custom_call.1} parent=1 // pred_check
      _
    $region3: #{tpu_custom_call.1} parent=1 // pred_check_branch
      %12 = sbr.rel (0) target = $region5
    $region4: #{tpu_custom_call.1} parent=1 // pred_region
      %s14 = ssub.s32 256, 256
      %15 = vsyncadd [#allocation3], %s14
      %s16 = sshll.u32 [#allocation2], 4
      %s17 = int_to_ptr.vmem [resolvable:$true] %s16
      %22 = dma.hbm_to_vmem [thread:$0]  %s0, 256, %s17, [#allocation3], 128, 128, 8
    $region5: #{tpu_custom_call.1} parent=1 // pred_fallthru
      _
    // Predicated region
    $region6: #{tpu_custom_call.1} parent=1 // pred_check
      _
    $region7: #{tpu_custom_call.1} parent=1 // pred_check_branch
      %24 = sbr.rel (0) target = $region9
    $region8: #{tpu_custom_call.1} parent=1 // pred_region
      %s26 = ssub.s32 2048, 2048
      %27 = vsyncadd [#allocation6], %s26
      %s28 = sshll.u32 [#allocation5], 4
      %s29 = int_to_ptr.vmem [resolvable:$true] %s28
      %34 = dma.hbm_to_vmem [thread:$0]  %s1, 2048, %s29, [#allocation6], 64, 64, 4
    $region9: #{tpu_custom_call.1} parent=1 // pred_fallthru
      _
    // Predicated region
    $region10: #{tpu_custom_call.1} parent=1 // pred_check
      _
    $region11: #{tpu_custom_call.1} parent=1 // pred_check_branch
      %36 = sbr.rel (0) target = $region13
    $region12: #{tpu_custom_call.1} parent=1 // pred_region
      _
    $region13: #{tpu_custom_call.1} parent=1 // pred_fallthru
      _
    // Predicated region
    $region14: #{tpu_custom_call.1} parent=1 // pred_check
      _
    $region15: #{tpu_custom_call.1} parent=1 // pred_check_branch
      %38 = sbr.rel (0) target = $region17
    $region16: #{tpu_custom_call.1} parent=1 // pred_region
      %39 = dma.done [#allocation3], 256
    $region17: #{tpu_custom_call.1} parent=1 // pred_fallthru
      _
    // Predicated region
    $region18: #{tpu_custom_call.1} parent=1 // pred_check
      _
    $region19: #{tpu_custom_call.1} parent=1 // pred_check_branch
      %41 = sbr.rel (0) target = $region21
    $region20: #{tpu_custom_call.1} parent=1 // pred_region
      %42 = dma.done [#allocation6], 2048
    $region21: #{tpu_custom_call.1} parent=1 // pred_fallthru
      _
    %v44 = vld [vmem:[#allocation2] sm:$0xff]
    %v45 = vld [vmem:[#allocation2 + $0x8] sm:$0xff]
    %v46 = vld [vmem:[#allocation5] sm:$0xf]
    %v47 = vld [vmem:[#allocation5 + $0x4] sm:$0xf]
    %v48 = vld [vmem:[#allocation5 + $0x8] sm:$0xf]
    %v49 = vld [vmem:[#allocation5 + $0xc] sm:$0xf]
    %v50 = vld [vmem:[#allocation5 + $0x10] sm:$0xf]
    %v51 = vld [vmem:[#allocation5 + $0x14] sm:$0xf]
    %v52 = vld [vmem:[#allocation5 + $0x18] sm:$0xf]
    %v53 = vld [vmem:[#allocation5 + $0x1c] sm:$0xf]
    %v54 = vld [vmem:[#allocation5 + $0x20] sm:$0xf]
    %v55 = vld [vmem:[#allocation5 + $0x24] sm:$0xf]
    %v56 = vld [vmem:[#allocation5 + $0x28] sm:$0xf]
    %v57 = vld [vmem:[#allocation5 + $0x2c] sm:$0xf]
    %v58 = vld [vmem:[#allocation5 + $0x30] sm:$0xf]
    %v59 = vld [vmem:[#allocation5 + $0x34] sm:$0xf]
    %v60 = vld [vmem:[#allocation5 + $0x38] sm:$0xf]
    %v61 = vld [vmem:[#allocation5 + $0x3c] sm:$0xf]
    %v62 = vld [vmem:[#allocation5 + $0x40] sm:$0xf]
    %v63 = vld [vmem:[#allocation5 + $0x44] sm:$0xf]
    %v64 = vld [vmem:[#allocation5 + $0x48] sm:$0xf]
    %v65 = vld [vmem:[#allocation5 + $0x4c] sm:$0xf]
    %v66 = vld [vmem:[#allocation5 + $0x50] sm:$0xf]
    %v67 = vld [vmem:[#allocation5 + $0x54] sm:$0xf]
    %v68 = vld [vmem:[#allocation5 + $0x58] sm:$0xf]
    %v69 = vld [vmem:[#allocation5 + $0x5c] sm:$0xf]
    %v70 = vld [vmem:[#allocation5 + $0x60] sm:$0xf]
    %v71 = vld [vmem:[#allocation5 + $0x64] sm:$0xf]
    %v72 = vld [vmem:[#allocation5 + $0x68] sm:$0xf]
    %v73 = vld [vmem:[#allocation5 + $0x6c] sm:$0xf]
    %v74 = vld [vmem:[#allocation5 + $0x70] sm:$0xf]
    %v75 = vld [vmem:[#allocation5 + $0x74] sm:$0xf]
    %v76 = vld [vmem:[#allocation5 + $0x78] sm:$0xf]
    %v77 = vld [vmem:[#allocation5 + $0x7c] sm:$0xf]
    %v78 = vld [vmem:[%s2] sm:$0x1]
    %v80 = vlaneseq
    %v81 = vshrl.u32 %v80, 7
    %v82 = vsub.s32 0, %v81
    %v83 = vrot.slane %v78, %v82
    %v87 = vunpack.c.l.b16 %v44
    %v88 = vunpack.c.h.b16 %v44
    %v89 = vunpack.c.l.b16 %v45
    %v90 = vunpack.c.h.b16 %v45
    %v91 = vpack.c.b16 %v89, %v87
    %v92 = vpack.c.b16 %v90, %v88
    %v127 = vunpack.c.l.b16 %v46
    %v128 = vunpack.c.l.b16 %v47
    %v129 = vunpack.c.l.b16 %v48
    %v130 = vunpack.c.l.b16 %v49
    %v131 = vunpack.c.l.b16 %v50
    %v132 = vunpack.c.l.b16 %v51
    %v133 = vunpack.c.l.b16 %v52
    %v134 = vunpack.c.l.b16 %v53
    %v135 = vunpack.c.l.b16 %v54
    %v136 = vunpack.c.l.b16 %v55
    %v137 = vunpack.c.l.b16 %v56
    %v138 = vunpack.c.l.b16 %v57
    %v139 = vunpack.c.l.b16 %v58
    %v140 = vunpack.c.l.b16 %v59
    %v141 = vunpack.c.l.b16 %v60
    %v142 = vunpack.c.l.b16 %v61
    %v143 = vunpack.c.l.b16 %v62
    %v144 = vunpack.c.l.b16 %v63
    %v145 = vunpack.c.l.b16 %v64
    %v146 = vunpack.c.l.b16 %v65
    %v147 = vunpack.c.l.b16 %v66
    %v148 = vunpack.c.l.b16 %v67
    %v149 = vunpack.c.l.b16 %v68
    %v150 = vunpack.c.l.b16 %v69
    %v151 = vunpack.c.l.b16 %v70
    %v152 = vunpack.c.l.b16 %v71
    %v153 = vunpack.c.l.b16 %v72
    %v154 = vunpack.c.l.b16 %v73
    %v155 = vunpack.c.l.b16 %v74
    %v156 = vunpack.c.l.b16 %v75
    %v157 = vunpack.c.l.b16 %v76
    %v158 = vunpack.c.l.b16 %v77
    %v159 = vpack.c.b16 %v128, %v127
    %v160 = vpack.c.b16 %v130, %v129
    %v161 = vpack.c.b16 %v132, %v131
    %v162 = vpack.c.b16 %v134, %v133
    %v163 = vpack.c.b16 %v136, %v135
    %v164 = vpack.c.b16 %v138, %v137
    %v165 = vpack.c.b16 %v140, %v139
    %v166 = vpack.c.b16 %v142, %v141
    %v167 = vpack.c.b16 %v144, %v143
    %v168 = vpack.c.b16 %v146, %v145
    %v169 = vpack.c.b16 %v148, %v147
    %v170 = vpack.c.b16 %v150, %v149
    %v171 = vpack.c.b16 %v152, %v151
    %v172 = vpack.c.b16 %v154, %v153
    %v173 = vpack.c.b16 %v156, %v155
    %v174 = vpack.c.b16 %v158, %v157
    %191 = vmatprep.subr.bf16.mxu0 0
    %192 = vmatpush1.bf16.msra.mxu0 %v166
    %193 = vmatprep.subr.bf16.mxu0 0
    %194 = vmatpush1.bf16.msra.mxu0 %v165
    %195 = vmatprep.subr.bf16.mxu0 0
    %196 = vmatpush1.bf16.msra.mxu0 %v164
    %197 = vmatprep.subr.bf16.mxu0 0
    %198 = vmatpush1.bf16.msra.mxu0 %v163
    %199 = vmatprep.subr.bf16.mxu0 0
    %200 = vmatpush1.bf16.msra.mxu0 %v162
    %201 = vmatprep.subr.bf16.mxu0 0
    %202 = vmatpush1.bf16.msra.mxu0 %v161
    %203 = vmatprep.subr.bf16.mxu0 0
    %204 = vmatpush1.bf16.msra.mxu0 %v160
    %205 = vmatprep.subr.bf16.mxu0 0
    %206 = vmatpush1.bf16.msra.mxu0 %v159
    %207 = vmatprep.subr.bf16.mxu0 0
    %208 = vmatpush2.bf16.msra.mxu0 %v174
    %209 = vmatprep.subr.bf16.mxu0 0
    %210 = vmatpush2.bf16.msra.mxu0 %v173
    %211 = vmatprep.subr.bf16.mxu0 0
    %212 = vmatpush2.bf16.msra.mxu0 %v172
    %213 = vmatprep.subr.bf16.mxu0 0
    %214 = vmatpush2.bf16.msra.mxu0 %v171
    %215 = vmatprep.subr.bf16.mxu0 0
    %216 = vmatpush2.bf16.msra.mxu0 %v170
    %217 = vmatprep.subr.bf16.mxu0 0
    %218 = vmatpush2.bf16.msra.mxu0 %v169
    %219 = vmatprep.subr.bf16.mxu0 0
    %220 = vmatpush2.bf16.msra.mxu0 %v168
    %221 = vmatprep.subr.bf16.mxu0 0
    %222 = vmatpush2.bf16.msra.mxu0 %v167
    %223 = vmatprep.mubr.bf16.mxu0 %v92
    %224 = vmatmul.mubr.bf16.gmra.mxu0 %v91
    %v225 = vpop.f32.mrf.mxu0
    %v226 = vadd.f32 %v83, %v225
    %v227 = vpop.f32.mrf.mxu0
    %v228 = vpop.f32.mrf.mxu0
    %v229 = vadd.f32 %v83, %v228
    %v230 = vpop.f32.mrf.mxu0
    %231 = vdwg.mxu0
    %232 = vst [vmem:[#allocation7] sm:$0xff] %v226
    %233 = vst [vmem:[#allocation7 + $0x8] sm:$0xff] %v229
    // Predicated region
    $region22: #{tpu_custom_call.1} parent=1 // pred_check
      _
    $region23: #{tpu_custom_call.1} parent=1 // pred_check_branch
      %235 = sbr.rel (0) target = $region25
    $region24: #{tpu_custom_call.1} parent=1 // pred_region
      %s237 = ssub.s32 256, 256
      %238 = vsyncadd [#allocation4], %s237
      %s239 = sshll.u32 [#allocation7], 4
      %s240 = int_to_ptr.vmem [resolvable:$true] %s239
      %245 = dma.vmem_to_hbm [thread:$0]  %s240, 256, %s3, [#allocation4], 128, 128, 8
    $region25: #{tpu_custom_call.1} parent=1 // pred_fallthru
      _
    // Predicated region
    $region26: #{tpu_custom_call.1} parent=1 // pred_check
      _
    $region27: #{tpu_custom_call.1} parent=1 // pred_check_branch
      %247 = sbr.rel (0) target = $region29
    $region28: #{tpu_custom_call.1} parent=1 // pred_region
      %248 = dma.done [#allocation4], 256
    $region29: #{tpu_custom_call.1} parent=1 // pred_fallthru
      _
    %249 = vsyncpa [#allocation3], 1
    %250 = vsyncpa [#allocation6], 1
    %251 = vsyncpa [#allocation4], 1

</llo_original>
